<compile_context>
chip_gen: v5e
topology: v5e:2x2
jax: 0.10.0
libtpu: 0.0.40
codegen_flags: <defaults>
</compile_context>

<pallas_src>
import functools

import jax
import jax.numpy as jnp
from jax.experimental import pallas as pl
from jax.experimental.pallas import tpu as pltpu

BN_EPS = 1e-5
LANE = 128

# row layout of the packed bias / gamma / beta slab
_B1, _G1, _BE1, _B2, _G2, _BE2, _B3, _G3, _BE3, _B4 = range(10)


def _round_up(n, m):
    return -(-n // m) * m


# ----------------------------------------------------------------------------
# Kernel: full encoder + pretraining_head MLP for one pass.  grid=(2,):
#   p == 0 -> clean input x
#   p == 1 -> corrupted input where(mask, x_random, x)
# ----------------------------------------------------------------------------
def scarf_kernel(x_ref, w1_ref, w2_ref, w3_ref, w4_ref, vec_ref, o_ref):
    h = x_ref[0]                                   # (B, in_pad) float32

    def linear(h, w_ref, b_row):
        # bf16 MXU matmul, f32 accumulate; bias add in f32.
        return (jnp.dot(h.astype(jnp.bfloat16), w_ref[...],
                        preferred_element_type=jnp.float32)
                + vec_ref[b_row:b_row + 1, :])

    def bn_relu(h, g_row, be_row):
        # training-mode BatchNorm1d (biased batch variance) + ReLU,
        # reusing the centered value for both var and normalization.
        mu = jnp.mean(h, axis=0, keepdims=True)
        hc = h - mu
        var = jnp.mean(hc * hc, axis=0, keepdims=True)
        h = (vec_ref[g_row:g_row + 1, :] * hc * jax.lax.rsqrt(var + BN_EPS)
             + vec_ref[be_row:be_row + 1, :])
        return jnp.maximum(h, 0.0)

    # TODO(synk): nn.Dropout is identity here (deterministic forward); torch
    # training-mode RNG dropout masks are not reproduced.

    # ---- encoder blocks 1 & 2: Linear -> BN -> ReLU -> (Dropout) ----
    h = bn_relu(linear(h, w1_ref, _B1), _G1, _BE1)
    h = bn_relu(linear(h, w2_ref, _B2), _G2, _BE2)
    # ---- pretraining head block 1: Linear -> BN -> ReLU -> (Dropout) ----
    h = bn_relu(linear(h, w3_ref, _B3), _G3, _BE3)
    # ---- pretraining head block 2: plain Linear -> (Dropout) ----
    h = linear(h, w4_ref, _B4)

    o_ref[0] = h.astype(o_ref.dtype)


def scarf_fused_forward(x_stack, packed):
    """One pallas_call producing both clean & corrupted embeddings (padded)."""
    _, B, in_pad = x_stack.shape
    emb_pad = packed["w4"].shape[1]

    full2d = lambda shape: pl.BlockSpec(shape, lambda p: (0, 0))

    out = pl.pallas_call(
        scarf_kernel,
        out_shape=jax.ShapeDtypeStruct((2, B, emb_pad), jnp.float32),
        grid=(2,),
        in_specs=[
            pl.BlockSpec((1, B, in_pad), lambda p: (p, 0, 0)),  # x / x_corr
            full2d((in_pad, emb_pad)),      # w1 (bf16)
            full2d((emb_pad, emb_pad)),     # w2 (bf16)
            full2d((emb_pad, emb_pad)),     # w3 (bf16)
            full2d((emb_pad, emb_pad)),     # w4 (bf16)
            full2d((10, emb_pad)),          # packed biases / gammas / betas
        ],
        out_specs=pl.BlockSpec((1, B, emb_pad), lambda p: (p, 0, 0)),
        compiler_params=pltpu.CompilerParams(
            dimension_semantics=("parallel",)),
    )(x_stack,
      packed["w1"], packed["w2"], packed["w3"], packed["w4"], packed["vec"])
    return out


# ----------------------------------------------------------------------------
# Parameter construction (shapes follow the PyTorch module) + packing/padding.
# ----------------------------------------------------------------------------
def make_params(key, input_dim, emb_dim):
    ks = jax.random.split(key, 8)
    scale = 0.1

    def lin(k, d_in, d_out):
        kw, kb = jax.random.split(k)
        w = scale * jax.random.normal(kw, (d_in, d_out), jnp.float32)
        b = scale * jax.random.normal(kb, (1, d_out), jnp.float32)
        return w, b

    def bn(k, d):
        kg, kb = jax.random.split(k)
        g = 1.0 + 0.05 * jax.random.normal(kg, (1, d), jnp.float32)
        be = 0.05 * jax.random.normal(kb, (1, d), jnp.float32)
        return g, be

    w1, b1 = lin(ks[0], input_dim, emb_dim)
    g1, be1 = bn(ks[1], emb_dim)
    w2, b2 = lin(ks[2], emb_dim, emb_dim)
    g2, be2 = bn(ks[3], emb_dim)
    w3, b3 = lin(ks[4], emb_dim, emb_dim)
    g3, be3 = bn(ks[5], emb_dim)
    w4, b4 = lin(ks[6], emb_dim, emb_dim)

    return dict(w1=w1, b1=b1, g1=g1, be1=be1,
                w2=w2, b2=b2, g2=g2, be2=be2,
                w3=w3, b3=b3, g3=g3, be3=be3,
                w4=w4, b4=b4)


def pack_params(params):
    """Zero-pad feature dims to 128 multiples, cast weights to bf16, and pack
    the 10 per-layer vectors into one (10, emb_pad) slab."""
    input_dim, emb_dim = params["w1"].shape
    in_pad = _round_up(input_dim, LANE)
    emb_pad = _round_up(emb_dim, LANE)

    def pad_w(w, rp, cp):
        return jnp.pad(w, ((0, rp - w.shape[0]), (0, cp - w.shape[1])))

    def pad_v(v):
        return jnp.pad(v, ((0, 0), (0, emb_pad - v.shape[1])))

    vec = jnp.concatenate(
        [pad_v(params[k]) for k in
         ("b1", "g1", "be1", "b2", "g2", "be2", "b3", "g3", "be3", "b4")],
        axis=0).astype(jnp.float32)                         # (10, emb_pad)

    return dict(
        w1=pad_w(params["w1"], in_pad, emb_pad).astype(jnp.bfloat16),
        w2=pad_w(params["w2"], emb_pad, emb_pad).astype(jnp.bfloat16),
        w3=pad_w(params["w3"], emb_pad, emb_pad).astype(jnp.bfloat16),
        w4=pad_w(params["w4"], emb_pad, emb_pad).astype(jnp.bfloat16),
        vec=vec,
    )


# ----------------------------------------------------------------------------
# Full SCARF_Custom.forward: (embeddings, embeddings_corrupted)
# ----------------------------------------------------------------------------
@functools.partial(jax.jit, static_argnames=("corruption_len", "emb_dim"))
def scarf_custom_forward(x, packed, features_low, features_high, key,
                         corruption_len, emb_dim):
    B, m = x.shape
    in_pad = _round_up(m, LANE)
    k_mask, k_rand = jax.random.split(key)

    # per-row random permutation -> first corruption_len features corrupted
    u = jax.random.uniform(k_mask, (B, m))
    ranks = jnp.argsort(jnp.argsort(u, axis=1), axis=1)
    corruption_mask = ranks < corruption_len

    # per-feature Uniform(low, high) marginals
    x_random = features_low[None, :] + jax.random.uniform(k_rand, (B, m)) * (
        features_high - features_low)[None, :]
    x_corrupted = jnp.where(corruption_mask, x_random, x)

    # stack clean + corrupted and pad the feature dim to a lane multiple
    x_stack = jnp.stack([x, x_corrupted], axis=0)           # (2, B, m)
    x_stack = jnp.pad(x_stack, ((0, 0), (0, 0), (0, in_pad - m)))

    out = scarf_fused_forward(x_stack, packed)
    embeddings = out[0, :, :emb_dim]
    embeddings_corrupted = out[1, :, :emb_dim]
    return embeddings, embeddings_corrupted


if __name__ == "__main__":
    # small shapes consistent with SCARF_Custom(input_dim, emb_dim,
    # encoder_depth=2, features_low, features_high, head_depth=2,
    # corruption_rate=0.6)
    B, input_dim, emb_dim = 8, 32, 32
    corruption_rate = 0.6
    corruption_len = int(corruption_rate * input_dim)

    root = jax.random.PRNGKey(0)
    k_x, k_p, k_lo, k_fwd = jax.random.split(root, 4)

    x = jax.random.normal(k_x, (B, input_dim), jnp.float32)
    features_low = -jnp.abs(jax.random.normal(k_lo, (input_dim,), jnp.float32))
    features_high = features_low + 2.0  # strictly > low, as Uniform requires

    params = make_params(k_p, input_dim, emb_dim)
    packed = pack_params(params)

    emb, emb_corr = scarf_custom_forward(
        x, packed, features_low, features_high, k_fwd, corruption_len, emb_dim)
    jax.block_until_ready((emb, emb_corr))

    assert emb.shape == (B, emb_dim) and emb_corr.shape == (B, emb_dim)
    assert jnp.all(jnp.isfinite(emb)) and jnp.all(jnp.isfinite(emb_corr))
    print("KERNEL_OK")
</pallas_src>

<mosaic_0001>
module attributes {stable_mosaic.version = 11 : i64} {
  func.func @scarf_kernel(%arg0: i32, %arg1: memref<1x8x128xf32, #tpu.memory_space<vmem>>, %arg2: memref<128x128xbf16, #tpu.memory_space<vmem>>, %arg3: memref<128x128xbf16, #tpu.memory_space<vmem>>, %arg4: memref<128x128xbf16, #tpu.memory_space<vmem>>, %arg5: memref<128x128xbf16, #tpu.memory_space<vmem>>, %arg6: memref<10x128xf32, #tpu.memory_space<vmem>>, %arg7: memref<1x8x128xf32, #tpu.memory_space<vmem>>) attributes {dimension_semantics = [#tpu.dimension_semantics<parallel>], iteration_bounds = array<i64: 2>, scalar_prefetch = 0 : i64, scratch_operands = 0 : i64, tpu.core_type = #tpu.core_type<tc>, window_params = [{transform_indices = @transform_0, window_bounds = array<i64: 1, 8, 128>}, {pipeline_mode = #tpu.pipeline_mode<synchronous>, transform_indices = @transform_1, window_bounds = array<i64: 128, 128>}, {pipeline_mode = #tpu.pipeline_mode<synchronous>, transform_indices = @transform_2, window_bounds = array<i64: 128, 128>}, {pipeline_mode = #tpu.pipeline_mode<synchronous>, transform_indices = @transform_3, window_bounds = array<i64: 128, 128>}, {pipeline_mode = #tpu.pipeline_mode<synchronous>, transform_indices = @transform_4, window_bounds = array<i64: 128, 128>}, {pipeline_mode = #tpu.pipeline_mode<synchronous>, transform_indices = @transform_5, window_bounds = array<i64: 10, 128>}, {transform_indices = @transform_6, window_bounds = array<i64: 1, 8, 128>}]} {
    %c0 = arith.constant 0 : index
    %c0_0 = arith.constant 0 : index
    %c0_1 = arith.constant 0 : index
    %0 = vector.load %arg1[%c0, %c0_0, %c0_1] : memref<1x8x128xf32, #tpu.memory_space<vmem>>, vector<1x8x128xf32>
    %1 = vector.shape_cast %0 : vector<1x8x128xf32> to vector<8x128xf32>
    %2 = arith.truncf %1 : vector<8x128xf32> to vector<8x128xbf16>
    %c0_2 = arith.constant 0 : index
    %c0_3 = arith.constant 0 : index
    %3 = vector.load %arg2[%c0_2, %c0_3] : memref<128x128xbf16, #tpu.memory_space<vmem>>, vector<128x128xbf16>
    %cst = arith.constant dense<0.000000e+00> : vector<8x128xf32>
    %4 = tpu.matmul %2, %3, %cst {dimension_numbers = #tpu.dot_dimension_numbers<[1], [0], [0], [1], [0, 0, 1, 1], [], []>} : vector<8x128xbf16>, vector<128x128xbf16>, vector<8x128xf32> -> vector<8x128xf32>
    %c0_4 = arith.constant 0 : index
    %c0_5 = arith.constant 0 : index
    %5 = vector.load %arg6[%c0_4, %c0_5] : memref<10x128xf32, #tpu.memory_space<vmem>>, vector<1x128xf32>
    %6 = vector.broadcast %5 : vector<1x128xf32> to vector<8x128xf32>
    %7 = arith.addf %4, %6 : vector<8x128xf32>
    %cst_6 = arith.constant dense<0.000000e+00> : vector<128xf32>
    %8 = vector.multi_reduction <add>, %7, %cst_6 [0] : vector<8x128xf32> to vector<128xf32>
    %9 = vector.shape_cast %8 : vector<128xf32> to vector<1x128xf32>
    %cst_7 = arith.constant 8.000000e+00 : f32
    %10 = vector.broadcast %cst_7 : f32 to vector<1x128xf32>
    %11 = arith.divf %9, %10 : vector<1x128xf32>
    %12 = vector.broadcast %11 : vector<1x128xf32> to vector<8x128xf32>
    %13 = arith.subf %7, %12 : vector<8x128xf32>
    %14 = arith.mulf %13, %13 : vector<8x128xf32>
    %cst_8 = arith.constant dense<0.000000e+00> : vector<128xf32>
    %15 = vector.multi_reduction <add>, %14, %cst_8 [0] : vector<8x128xf32> to vector<128xf32>
    %16 = vector.shape_cast %15 : vector<128xf32> to vector<1x128xf32>
    %cst_9 = arith.constant 8.000000e+00 : f32
    %17 = vector.broadcast %cst_9 : f32 to vector<1x128xf32>
    %18 = arith.divf %16, %17 : vector<1x128xf32>
    %c1 = arith.constant 1 : index
    %c0_10 = arith.constant 0 : index
    %19 = vector.load %arg6[%c1, %c0_10] : memref<10x128xf32, #tpu.memory_space<vmem>>, vector<1x128xf32>
    %20 = vector.broadcast %19 : vector<1x128xf32> to vector<8x128xf32>
    %21 = arith.mulf %20, %13 : vector<8x128xf32>
    %cst_11 = arith.constant 9.99999974E-6 : f32
    %22 = vector.broadcast %cst_11 : f32 to vector<1x128xf32>
    %23 = arith.addf %18, %22 : vector<1x128xf32>
    %24 = math.rsqrt %23 : vector<1x128xf32>
    %25 = vector.broadcast %24 : vector<1x128xf32> to vector<8x128xf32>
    %26 = arith.mulf %21, %25 : vector<8x128xf32>
    %c2 = arith.constant 2 : index
    %c0_12 = arith.constant 0 : index
    %27 = vector.load %arg6[%c2, %c0_12] : memref<10x128xf32, #tpu.memory_space<vmem>>, vector<1x128xf32>
    %28 = vector.broadcast %27 : vector<1x128xf32> to vector<8x128xf32>
    %29 = arith.addf %26, %28 : vector<8x128xf32>
    %cst_13 = arith.constant 0.000000e+00 : f32
    %30 = vector.broadcast %cst_13 : f32 to vector<8x128xf32>
    %31 = arith.maximumf %29, %30 : vector<8x128xf32>
    %32 = arith.truncf %31 : vector<8x128xf32> to vector<8x128xbf16>
    %c0_14 = arith.constant 0 : index
    %c0_15 = arith.constant 0 : index
    %33 = vector.load %arg3[%c0_14, %c0_15] : memref<128x128xbf16, #tpu.memory_space<vmem>>, vector<128x128xbf16>
    %cst_16 = arith.constant dense<0.000000e+00> : vector<8x128xf32>
    %34 = tpu.matmul %32, %33, %cst_16 {dimension_numbers = #tpu.dot_dimension_numbers<[1], [0], [0], [1], [0, 0, 1, 1], [], []>} : vector<8x128xbf16>, vector<128x128xbf16>, vector<8x128xf32> -> vector<8x128xf32>
    %c3 = arith.constant 3 : index
    %c0_17 = arith.constant 0 : index
    %35 = vector.load %arg6[%c3, %c0_17] : memref<10x128xf32, #tpu.memory_space<vmem>>, vector<1x128xf32>
    %36 = vector.broadcast %35 : vector<1x128xf32> to vector<8x128xf32>
    %37 = arith.addf %34, %36 : vector<8x128xf32>
    %cst_18 = arith.constant dense<0.000000e+00> : vector<128xf32>
    %38 = vector.multi_reduction <add>, %37, %cst_18 [0] : vector<8x128xf32> to vector<128xf32>
    %39 = vector.shape_cast %38 : vector<128xf32> to vector<1x128xf32>
    %cst_19 = arith.constant 8.000000e+00 : f32
    %40 = vector.broadcast %cst_19 : f32 to vector<1x128xf32>
    %41 = arith.divf %39, %40 : vector<1x128xf32>
    %42 = vector.broadcast %41 : vector<1x128xf32> to vector<8x128xf32>
    %43 = arith.subf %37, %42 : vector<8x128xf32>
    %44 = arith.mulf %43, %43 : vector<8x128xf32>
    %cst_20 = arith.constant dense<0.000000e+00> : vector<128xf32>
    %45 = vector.multi_reduction <add>, %44, %cst_20 [0] : vector<8x128xf32> to vector<128xf32>
    %46 = vector.shape_cast %45 : vector<128xf32> to vector<1x128xf32>
    %cst_21 = arith.constant 8.000000e+00 : f32
    %47 = vector.broadcast %cst_21 : f32 to vector<1x128xf32>
    %48 = arith.divf %46, %47 : vector<1x128xf32>
    %c4 = arith.constant 4 : index
    %c0_22 = arith.constant 0 : index
    %49 = vector.load %arg6[%c4, %c0_22] : memref<10x128xf32, #tpu.memory_space<vmem>>, vector<1x128xf32>
    %50 = vector.broadcast %49 : vector<1x128xf32> to vector<8x128xf32>
    %51 = arith.mulf %50, %43 : vector<8x128xf32>
    %cst_23 = arith.constant 9.99999974E-6 : f32
    %52 = vector.broadcast %cst_23 : f32 to vector<1x128xf32>
    %53 = arith.addf %48, %52 : vector<1x128xf32>
    %54 = math.rsqrt %53 : vector<1x128xf32>
    %55 = vector.broadcast %54 : vector<1x128xf32> to vector<8x128xf32>
    %56 = arith.mulf %51, %55 : vector<8x128xf32>
    %c5 = arith.constant 5 : index
    %c0_24 = arith.constant 0 : index
    %57 = vector.load %arg6[%c5, %c0_24] : memref<10x128xf32, #tpu.memory_space<vmem>>, vector<1x128xf32>
    %58 = vector.broadcast %57 : vector<1x128xf32> to vector<8x128xf32>
    %59 = arith.addf %56, %58 : vector<8x128xf32>
    %cst_25 = arith.constant 0.000000e+00 : f32
    %60 = vector.broadcast %cst_25 : f32 to vector<8x128xf32>
    %61 = arith.maximumf %59, %60 : vector<8x128xf32>
    %62 = arith.truncf %61 : vector<8x128xf32> to vector<8x128xbf16>
    %c0_26 = arith.constant 0 : index
    %c0_27 = arith.constant 0 : index
    %63 = vector.load %arg4[%c0_26, %c0_27] : memref<128x128xbf16, #tpu.memory_space<vmem>>, vector<128x128xbf16>
    %cst_28 = arith.constant dense<0.000000e+00> : vector<8x128xf32>
    %64 = tpu.matmul %62, %63, %cst_28 {dimension_numbers = #tpu.dot_dimension_numbers<[1], [0], [0], [1], [0, 0, 1, 1], [], []>} : vector<8x128xbf16>, vector<128x128xbf16>, vector<8x128xf32> -> vector<8x128xf32>
    %c6 = arith.constant 6 : index
    %c0_29 = arith.constant 0 : index
    %65 = vector.load %arg6[%c6, %c0_29] : memref<10x128xf32, #tpu.memory_space<vmem>>, vector<1x128xf32>
    %66 = vector.broadcast %65 : vector<1x128xf32> to vector<8x128xf32>
    %67 = arith.addf %64, %66 : vector<8x128xf32>
    %cst_30 = arith.constant dense<0.000000e+00> : vector<128xf32>
    %68 = vector.multi_reduction <add>, %67, %cst_30 [0] : vector<8x128xf32> to vector<128xf32>
    %69 = vector.shape_cast %68 : vector<128xf32> to vector<1x128xf32>
    %cst_31 = arith.constant 8.000000e+00 : f32
    %70 = vector.broadcast %cst_31 : f32 to vector<1x128xf32>
    %71 = arith.divf %69, %70 : vector<1x128xf32>
    %72 = vector.broadcast %71 : vector<1x128xf32> to vector<8x128xf32>
    %73 = arith.subf %67, %72 : vector<8x128xf32>
    %74 = arith.mulf %73, %73 : vector<8x128xf32>
    %cst_32 = arith.constant dense<0.000000e+00> : vector<128xf32>
    %75 = vector.multi_reduction <add>, %74, %cst_32 [0] : vector<8x128xf32> to vector<128xf32>
    %76 = vector.shape_cast %75 : vector<128xf32> to vector<1x128xf32>
    %cst_33 = arith.constant 8.000000e+00 : f32
    %77 = vector.broadcast %cst_33 : f32 to vector<1x128xf32>
    %78 = arith.divf %76, %77 : vector<1x128xf32>
    %c7 = arith.constant 7 : index
    %c0_34 = arith.constant 0 : index
    %79 = vector.load %arg6[%c7, %c0_34] : memref<10x128xf32, #tpu.memory_space<vmem>>, vector<1x128xf32>
    %80 = vector.broadcast %79 : vector<1x128xf32> to vector<8x128xf32>
    %81 = arith.mulf %80, %73 : vector<8x128xf32>
    %cst_35 = arith.constant 9.99999974E-6 : f32
    %82 = vector.broadcast %cst_35 : f32 to vector<1x128xf32>
    %83 = arith.addf %78, %82 : vector<1x128xf32>
    %84 = math.rsqrt %83 : vector<1x128xf32>
    %85 = vector.broadcast %84 : vector<1x128xf32> to vector<8x128xf32>
    %86 = arith.mulf %81, %85 : vector<8x128xf32>
    %c8 = arith.constant 8 : index
    %c0_36 = arith.constant 0 : index
    %87 = vector.load %arg6[%c8, %c0_36] : memref<10x128xf32, #tpu.memory_space<vmem>>, vector<1x128xf32>
    %88 = vector.broadcast %87 : vector<1x128xf32> to vector<8x128xf32>
    %89 = arith.addf %86, %88 : vector<8x128xf32>
    %cst_37 = arith.constant 0.000000e+00 : f32
    %90 = vector.broadcast %cst_37 : f32 to vector<8x128xf32>
    %91 = arith.maximumf %89, %90 : vector<8x128xf32>
    %92 = arith.truncf %91 : vector<8x128xf32> to vector<8x128xbf16>
    %c0_38 = arith.constant 0 : index
    %c0_39 = arith.constant 0 : index
    %93 = vector.load %arg5[%c0_38, %c0_39] : memref<128x128xbf16, #tpu.memory_space<vmem>>, vector<128x128xbf16>
    %cst_40 = arith.constant dense<0.000000e+00> : vector<8x128xf32>
    %94 = tpu.matmul %92, %93, %cst_40 {dimension_numbers = #tpu.dot_dimension_numbers<[1], [0], [0], [1], [0, 0, 1, 1], [], []>} : vector<8x128xbf16>, vector<128x128xbf16>, vector<8x128xf32> -> vector<8x128xf32>
    %c9 = arith.constant 9 : index
    %c0_41 = arith.constant 0 : index
    %95 = vector.load %arg6[%c9, %c0_41] : memref<10x128xf32, #tpu.memory_space<vmem>>, vector<1x128xf32>
    %96 = vector.broadcast %95 : vector<1x128xf32> to vector<8x128xf32>
    %97 = arith.addf %94, %96 : vector<8x128xf32>
    %c0_42 = arith.constant 0 : index
    %c0_43 = arith.constant 0 : index
    %c0_44 = arith.constant 0 : index
    %98 = vector.load %arg7[%c0_42, %c0_43, %c0_44] : memref<1x8x128xf32, #tpu.memory_space<vmem>>, vector<1x8x128xf32>
    %99 = vector.shape_cast %98 : vector<1x8x128xf32> to vector<8x128xf32>
    %100 = vector.shape_cast %97 : vector<8x128xf32> to vector<1x8x128xf32>
    tpu.vector_store %arg7[%c0_42, %c0_43, %c0_44], %100 {strides = array<i32>} : memref<1x8x128xf32, #tpu.memory_space<vmem>>, vector<1x8x128xf32>,
    return
  }
  func.func @transform_0(%arg0: i32) -> (i32, i32, i32) {
    %c0_i32 = arith.constant 0 : i32
    %c0_i32_0 = arith.constant 0 : i32
    %c0_i32_1 = arith.constant 0 : i32
    return %arg0, %c0_i32, %c0_i32_0 : i32, i32, i32
  }
  func.func @transform_1(%arg0: i32) -> (i32, i32) {
    %c0_i32 = arith.constant 0 : i32
    %c0_i32_0 = arith.constant 0 : i32
    %c0_i32_1 = arith.constant 0 : i32
    return %c0_i32, %c0_i32_0 : i32, i32
  }
  func.func @transform_2(%arg0: i32) -> (i32, i32) {
    %c0_i32 = arith.constant 0 : i32
    %c0_i32_0 = arith.constant 0 : i32
    %c0_i32_1 = arith.constant 0 : i32
    return %c0_i32, %c0_i32_0 : i32, i32
  }
  func.func @transform_3(%arg0: i32) -> (i32, i32) {
    %c0_i32 = arith.constant 0 : i32
    %c0_i32_0 = arith.constant 0 : i32
    %c0_i32_1 = arith.constant 0 : i32
    return %c0_i32, %c0_i32_0 : i32, i32
  }
  func.func @transform_4(%arg0: i32) -> (i32, i32) {
    %c0_i32 = arith.constant 0 : i32
    %c0_i32_0 = arith.constant 0 : i32
    %c0_i32_1 = arith.constant 0 : i32
    return %c0_i32, %c0_i32_0 : i32, i32
  }
  func.func @transform_5(%arg0: i32) -> (i32, i32) {
    %c0_i32 = arith.constant 0 : i32
    %c0_i32_0 = arith.constant 0 : i32
    %c0_i32_1 = arith.constant 0 : i32
    return %c0_i32, %c0_i32_0 : i32, i32
  }
  func.func @transform_6(%arg0: i32) -> (i32, i32, i32) {
    %c0_i32 = arith.constant 0 : i32
    %c0_i32_0 = arith.constant 0 : i32
    %c0_i32_1 = arith.constant 0 : i32
    return %arg0, %c0_i32, %c0_i32_0 : i32, i32, i32
  }
}

</mosaic_0001>

<llo_original>
// kernel: sub.7
$region0: #{sub.7}
  #allocation0 [shape = 's32[1]{0}', space=sflag, size = 0x4, scoped, tag = 'scoped memory for sub.7']
  %s0 = inlined_call_operand.vmem [shape: f32[32], index: 0, kind: input, shape index: {}]
  %s1 = inlined_call_operand.vmem [shape: f32[32], index: 1, kind: input, shape index: {}]
  %s2 = inlined_call_operand.vmem [shape: f32[32], index: 2, kind: output, shape index: {}]
  %v3 = vld [vmem:[%s0] sm:$0x1]
  %v4 = vld [vmem:[%s1] sm:$0x1]
  %5 = xla_tuple %v3, %v4
  %6 = xla_tuple %5
  %v7 = vsub.f32 %v3, %v4
  %8 = xla_tuple %v7
  %9 = vst [vmem:[%s2] sm:$0x1] %v7

// kernel: scarf_custom_forward.3
$region0: #{scarf_custom_forward.3}
  #allocation0 [shape = 'u32[]', space=smem, size = 0x4, offset = 0x4, fixed_abs, tag = 'smem constant byte address 0x4 - core index']
  #allocation1 [shape = 'u32[72,128]{1,0:T(1,128)}', space=vmem, size = 0x9000, scoped, tag = 'internal scratch']
  %s0 = inlined_call_operand.vmem [shape: f32[2,8,128], index: 0, kind: input, shape index: {}]
  %s1 = inlined_call_operand.vmem [shape: bf16[128,128], index: 1, kind: input, shape index: {}]
  %s2 = inlined_call_operand.vmem [shape: bf16[128,128], index: 2, kind: input, shape index: {}]
  %s3 = inlined_call_operand.vmem [shape: bf16[128,128], index: 3, kind: input, shape index: {}]
  %s4 = inlined_call_operand.vmem [shape: bf16[128,128], index: 4, kind: input, shape index: {}]
  %s5 = inlined_call_operand.vmem [shape: f32[10,128], index: 5, kind: input, shape index: {}]
  %s6 = inlined_call_operand.vmem [shape: f32[2,8,128], index: 6, kind: output, shape index: {}]
  %s7 = sld [smem:[#allocation0]]
  $region57: #{scarf_custom_forward.3} parent=0
    _
  %s9 = ssub.s32 1, %s7
  %s10 = scalar_select 0, %s9, %s7
  loop: start=0, step=1, limit=4
  $region2: #{scarf_custom_forward.3} parent=0 // loop_pre_header
    _
  $region3: #{scarf_custom_forward.3} parent=0 // loop_header
    %s12 = sphi 0, %s16
    %p13 = scmp.ge.s32.totalorder %s12, 4
    %s22 = sphi 0, %s24
    %s25 = sphi 0, %s22
    %s26 = sphi 0, %s25
    %s42 = sphi 0, %s26
    %s46 = sphi 0, %s46
    %s48 = sphi 0, %s46
    %s49 = sphi 0, %s48
    %s63 = sphi 0, %s49
    %s67 = sphi 0, %s67
    %s69 = sphi 0, %s67
    %s70 = sphi 0, %s69
    %s84 = sphi 0, %s70
    %s88 = sphi 0, %s88
    %s90 = sphi 0, %s88
    %s91 = sphi 0, %s90
    %s105 = sphi 0, %s91
    %s109 = sphi 0, %s109
    %s111 = sphi 0, %s109
    %s112 = sphi 0, %s111
    %s126 = sphi 0, %s112
    %s130 = sphi 0, %s130
    %s132 = sphi 0, %s130
    %s133 = sphi 0, %s132
    %s147 = sphi 0, %s133
    %s153 = sphi 0, %s155
    %s156 = sphi 0, %s153
    %s157 = sphi 0, %s156
    %s173 = sphi 0, %s157
  $region4: #{scarf_custom_forward.3} parent=0 // loop_header_branch
    %15 = sbr.rel (%p13) target = $region8
  $region5: #{scarf_custom_forward.3} parent=0 // loop_body
    %s17 = ssub.s32 %s12, 1
    %s18 = ssub.s32 %s12, 2
    %s19 = sadd.s32 %s12, 1
    %s20 = ssub.s32 %s12, %s19
    %p21 = scmp.eq.s32.totalorder %s20, 0
    %s23 = sadd.s32 %s22, 1
    %s24 = scalar_select %p21, %s22, %s23
    %p27 = pneg %p21
    %p28 = scmp.eq.s32.totalorder %s12, 1
    %p29 = por %p27, %p28
    %p30 = scmp.ne.s32.totalorder %s22, %s25
    %p31 = scmp.eq.s32.totalorder %s12, 0
    %p32 = por %p30, %p31
    %p33 = scmp.ne.s32.totalorder %s22, %s25
    %p34 = scmp.eq.s32.totalorder %s17, 1
    %p35 = por %p33, %p34
    %p36 = scmp.ne.s32.totalorder %s25, %s26
    %p37 = scmp.eq.s32.totalorder %s17, 0
    %p38 = por %p36, %p37
    %p39 = scmp.ne.s32.totalorder %s25, %s26
    %p40 = scmp.eq.s32.totalorder %s18, 1
    %p41 = por %p39, %p40
    %p43 = scmp.ne.s32.totalorder %s26, %s42
    %p44 = scmp.eq.s32.totalorder %s18, 0
    %p45 = por %p43, %p44
    %s47 = sadd.s32 %s46, 1
    %p50 = scmp.eq.s32.totalorder %s12, 1
    %p51 = scmp.ne.s32.totalorder %s46, %s48
    %p52 = scmp.eq.s32.totalorder %s12, 0
    %p53 = por %p51, %p52
    %p54 = scmp.ne.s32.totalorder %s46, %s48
    %p55 = scmp.eq.s32.totalorder %s17, 1
    %p56 = por %p54, %p55
    %p57 = scmp.ne.s32.totalorder %s48, %s49
    %p58 = scmp.eq.s32.totalorder %s17, 0
    %p59 = por %p57, %p58
    %p60 = scmp.ne.s32.totalorder %s48, %s49
    %p61 = scmp.eq.s32.totalorder %s18, 1
    %p62 = por %p60, %p61
    %p64 = scmp.ne.s32.totalorder %s49, %s63
    %p65 = scmp.eq.s32.totalorder %s18, 0
    %p66 = por %p64, %p65
    %s68 = sadd.s32 %s67, 1
    %p71 = scmp.eq.s32.totalorder %s12, 1
    %p72 = scmp.ne.s32.totalorder %s67, %s69
    %p73 = scmp.eq.s32.totalorder %s12, 0
    %p74 = por %p72, %p73
    %p75 = scmp.ne.s32.totalorder %s67, %s69
    %p76 = scmp.eq.s32.totalorder %s17, 1
    %p77 = por %p75, %p76
    %p78 = scmp.ne.s32.totalorder %s69, %s70
    %p79 = scmp.eq.s32.totalorder %s17, 0
    %p80 = por %p78, %p79
    %p81 = scmp.ne.s32.totalorder %s69, %s70
    %p82 = scmp.eq.s32.totalorder %s18, 1
    %p83 = por %p81, %p82
    %p85 = scmp.ne.s32.totalorder %s70, %s84
    %p86 = scmp.eq.s32.totalorder %s18, 0
    %p87 = por %p85, %p86
    %s89 = sadd.s32 %s88, 1
    %p92 = scmp.eq.s32.totalorder %s12, 1
    %p93 = scmp.ne.s32.totalorder %s88, %s90
    %p94 = scmp.eq.s32.totalorder %s12, 0
    %p95 = por %p93, %p94
    %p96 = scmp.ne.s32.totalorder %s88, %s90
    %p97 = scmp.eq.s32.totalorder %s17, 1
    %p98 = por %p96, %p97
    %p99 = scmp.ne.s32.totalorder %s90, %s91
    %p100 = scmp.eq.s32.totalorder %s17, 0
    %p101 = por %p99, %p100
    %p102 = scmp.ne.s32.totalorder %s90, %s91
    %p103 = scmp.eq.s32.totalorder %s18, 1
    %p104 = por %p102, %p103
    %p106 = scmp.ne.s32.totalorder %s91, %s105
    %p107 = scmp.eq.s32.totalorder %s18, 0
    %p108 = por %p106, %p107
    %s110 = sadd.s32 %s109, 1
    %p113 = scmp.eq.s32.totalorder %s12, 1
    %p114 = scmp.ne.s32.totalorder %s109, %s111
    %p115 = scmp.eq.s32.totalorder %s12, 0
    %p116 = por %p114, %p115
    %p117 = scmp.ne.s32.totalorder %s109, %s111
    %p118 = scmp.eq.s32.totalorder %s17, 1
    %p119 = por %p117, %p118
    %p120 = scmp.ne.s32.totalorder %s111, %s112
    %p121 = scmp.eq.s32.totalorder %s17, 0
    %p122 = por %p120, %p121
    %p123 = scmp.ne.s32.totalorder %s111, %s112
    %p124 = scmp.eq.s32.totalorder %s18, 1
    %p125 = por %p123, %p124
    %p127 = scmp.ne.s32.totalorder %s112, %s126
    %p128 = scmp.eq.s32.totalorder %s18, 0
    %p129 = por %p127, %p128
    %s131 = sadd.s32 %s130, 1
    %p134 = scmp.eq.s32.totalorder %s12, 1
    %p135 = scmp.ne.s32.totalorder %s130, %s132
    %p136 = scmp.eq.s32.totalorder %s12, 0
    %p137 = por %p135, %p136
    %p138 = scmp.ne.s32.totalorder %s130, %s132
    %p139 = scmp.eq.s32.totalorder %s17, 1
    %p140 = por %p138, %p139
    %p141 = scmp.ne.s32.totalorder %s132, %s133
    %p142 = scmp.eq.s32.totalorder %s17, 0
    %p143 = por %p141, %p142
    %p144 = scmp.ne.s32.totalorder %s132, %s133
    %p145 = scmp.eq.s32.totalorder %s18, 1
    %p146 = por %p144, %p145
    %p148 = scmp.ne.s32.totalorder %s133, %s147
    %p149 = scmp.eq.s32.totalorder %s18, 0
    %p150 = por %p148, %p149
    %s151 = ssub.s32 %s12, %s19
    %p152 = scmp.eq.s32.totalorder %s151, 0
    %s154 = sadd.s32 %s153, 1
    %s155 = scalar_select %p152, %s153, %s154
    %p158 = pneg %p152
    %p159 = scmp.eq.s32.totalorder %s12, 1
    %p160 = por %p158, %p159
    %p161 = scmp.ne.s32.totalorder %s153, %s156
    %p162 = scmp.eq.s32.totalorder %s12, 0
    %p163 = por %p161, %p162
    %p164 = scmp.ne.s32.totalorder %s153, %s156
    %p165 = scmp.eq.s32.totalorder %s17, 1
    %p166 = por %p164, %p165
    %p167 = scmp.ne.s32.totalorder %s156, %s157
    %p168 = scmp.eq.s32.totalorder %s17, 0
    %p169 = por %p167, %p168
    %p170 = scmp.ne.s32.totalorder %s156, %s157
    %p171 = scmp.eq.s32.totalorder %s18, 1
    %p172 = por %p170, %p171
    %p174 = scmp.ne.s32.totalorder %s157, %s173
    %p175 = scmp.eq.s32.totalorder %s18, 0
    %p176 = por %p174, %p175
    %p177 = scmp.le.s32.totalorder 1, %s12
    %p178 = scmp.lt.s32.totalorder %s12, 3
    %p179 = pnand %p177, %p178
    %p180 = pneg %p179
    // Predicated region
    $region9: #{scarf_custom_forward.3} parent=5 // pred_check
      _
    $region10: #{scarf_custom_forward.3} parent=5 // pred_check_branch
      %182 = sbr.rel (%p179) target = $region12
    $region11: #{scarf_custom_forward.3} parent=5 // pred_region
      %s183 = ssub.s32 %s12, 1
      // Predicated region
      $region13: #{scarf_custom_forward.3} parent=11 // pred_check
        %p184 = pneg %p59
      $region14: #{scarf_custom_forward.3} parent=11 // pred_check_branch
        %186 = sbr.rel (%p184) target = $region16
      $region15: #{scarf_custom_forward.3} parent=11 // pred_region
        _
      $region16: #{scarf_custom_forward.3} parent=11 // pred_fallthru
        _
      // Predicated region
      $region17: #{scarf_custom_forward.3} parent=11 // pred_check
        %p187 = pneg %p80
      $region18: #{scarf_custom_forward.3} parent=11 // pred_check_branch
        %189 = sbr.rel (%p187) target = $region20
      $region19: #{scarf_custom_forward.3} parent=11 // pred_region
        _
      $region20: #{scarf_custom_forward.3} parent=11 // pred_fallthru
        _
      // Predicated region
      $region21: #{scarf_custom_forward.3} parent=11 // pred_check
        %p190 = pneg %p101
      $region22: #{scarf_custom_forward.3} parent=11 // pred_check_branch
        %192 = sbr.rel (%p190) target = $region24
      $region23: #{scarf_custom_forward.3} parent=11 // pred_region
        _
      $region24: #{scarf_custom_forward.3} parent=11 // pred_fallthru
        _
      // Predicated region
      $region25: #{scarf_custom_forward.3} parent=11 // pred_check
        %p193 = pneg %p122
      $region26: #{scarf_custom_forward.3} parent=11 // pred_check_branch
        %195 = sbr.rel (%p193) target = $region28
      $region27: #{scarf_custom_forward.3} parent=11 // pred_region
        _
      $region28: #{scarf_custom_forward.3} parent=11 // pred_fallthru
        _
      // Predicated region
      $region29: #{scarf_custom_forward.3} parent=11 // pred_check
        %p196 = pneg %p143
      $region30: #{scarf_custom_forward.3} parent=11 // pred_check_branch
        %198 = sbr.rel (%p196) target = $region32
      $region31: #{scarf_custom_forward.3} parent=11 // pred_region
        _
      $region32: #{scarf_custom_forward.3} parent=11 // pred_fallthru
        _
    $region12: #{scarf_custom_forward.3} parent=5 // pred_fallthru
      _
    %p199 = scmp.lt.s32.totalorder %s12, 2
    // Predicated region
    $region33: #{scarf_custom_forward.3} parent=5 // pred_check
      %p200 = pneg %p199
    $region34: #{scarf_custom_forward.3} parent=5 // pred_check_branch
      %202 = sbr.rel (%p200) target = $region36
    $region35: #{scarf_custom_forward.3} parent=5 // pred_region
      // Predicated region
      $region37: #{scarf_custom_forward.3} parent=35 // pred_check
        %p203 = pneg %p32
      $region38: #{scarf_custom_forward.3} parent=35 // pred_check_branch
        %205 = sbr.rel (%p203) target = $region40
      $region39: #{scarf_custom_forward.3} parent=35 // pred_region
        %p206 = scmp.lt.s32.totalorder %s12, 1
        %s207 = scalar_select %p206, %s12, 1
        %s208 = smul.addr %s207, 8
        %s209 = scalar_lea.vmem %s0, %s208
      $region40: #{scarf_custom_forward.3} parent=35 // pred_fallthru
        _
    $region36: #{scarf_custom_forward.3} parent=5 // pred_fallthru
      _
    %p210 = scmp.le.s32.totalorder 1, %s12
    %p211 = scmp.lt.s32.totalorder %s12, 3
    %p212 = pnand %p210, %p211
    %p213 = pneg %p212
    // Predicated region
    $region41: #{scarf_custom_forward.3} parent=5 // pred_check
      _
    $region42: #{scarf_custom_forward.3} parent=5 // pred_check_branch
      %215 = sbr.rel (%p212) target = $region44
    $region43: #{scarf_custom_forward.3} parent=5 // pred_region
      %s216 = ssub.s32 %s12, 1
      %p217 = scmp.lt.s32.totalorder %s17, 1
      %s218 = scalar_select %p217, %s17, 1
      %s219 = smul.addr %s218, 8
      %s220 = scalar_lea.vmem %s0, %s219
      %p221 = pneg %p38
      %p222 = pneg %p35
      %p223 = pneg %p59
      %p224 = pneg %p56
      %p225 = pneg %p80
      %p226 = pneg %p77
      %p227 = pneg %p101
      %p228 = pneg %p98
      %p229 = pneg %p122
      %p230 = pneg %p119
      %p231 = pneg %p143
      %p232 = pneg %p140
      %p233 = pneg %p169
      %p234 = pneg %p166
      %p235 = scmp.lt.s32.totalorder %s17, 1
      %s236 = scalar_select %p235, %s17, 1
      %s237 = smul.addr %s236, 8
      %s238 = scalar_lea.vmem %s6, %s237
      %p239 = scmp.lt.s32.totalorder %s17, 1
      %s240 = scalar_select %p239, %s17, 1
      %s241 = smul.addr %s240, 8
      %s242 = scalar_lea.vmem %s0, %s241
      %p243 = scmp.lt.s32.totalorder %s17, 1
      %s244 = scalar_select %p243, %s17, 1
      %s245 = smul.addr %s244, 8
      %s246 = scalar_lea.vmem %s6, %s245
      %v247 = vld [vmem:[%s242] sm:$0xff]
      %v248 = vpack.c.bf16 %v247, %v247
      %v249 = vld [vmem:[%s1] sm:$0xf]
      %v250 = vld [vmem:[%s1 + $0x4] sm:$0xf]
      %v251 = vld [vmem:[%s1 + $0x8] sm:$0xf]
      %v252 = vld [vmem:[%s1 + $0xc] sm:$0xf]
      %v253 = vld [vmem:[%s1 + $0x10] sm:$0xf]
      %v254 = vld [vmem:[%s1 + $0x14] sm:$0xf]
      %v255 = vld [vmem:[%s1 + $0x18] sm:$0xf]
      %v256 = vld [vmem:[%s1 + $0x1c] sm:$0xf]
      %v257 = vld [vmem:[%s1 + $0x20] sm:$0xf]
      %v258 = vld [vmem:[%s1 + $0x24] sm:$0xf]
      %v259 = vld [vmem:[%s1 + $0x28] sm:$0xf]
      %v260 = vld [vmem:[%s1 + $0x2c] sm:$0xf]
      %v261 = vld [vmem:[%s1 + $0x30] sm:$0xf]
      %v262 = vld [vmem:[%s1 + $0x34] sm:$0xf]
      %v263 = vld [vmem:[%s1 + $0x38] sm:$0xf]
      %v264 = vld [vmem:[%s1 + $0x3c] sm:$0xf]
      %v265 = vld [vmem:[%s5] sm:$0x1]
      %v266 = vperm.slane %v265, 0
      %v283 = vunpack.c.l.b16 %v249
      %v284 = vunpack.c.l.b16 %v250
      %v285 = vunpack.c.l.b16 %v251
      %v286 = vunpack.c.l.b16 %v252
      %v287 = vunpack.c.l.b16 %v253
      %v288 = vunpack.c.l.b16 %v254
      %v289 = vunpack.c.l.b16 %v255
      %v290 = vunpack.c.l.b16 %v256
      %v291 = vunpack.c.l.b16 %v257
      %v292 = vunpack.c.l.b16 %v258
      %v293 = vunpack.c.l.b16 %v259
      %v294 = vunpack.c.l.b16 %v260
      %v295 = vunpack.c.l.b16 %v261
      %v296 = vunpack.c.l.b16 %v262
      %v297 = vunpack.c.l.b16 %v263
      %v298 = vunpack.c.l.b16 %v264
      %v299 = vpack.c.b16 %v284, %v283
      %v300 = vpack.c.b16 %v286, %v285
      %v301 = vpack.c.b16 %v288, %v287
      %v302 = vpack.c.b16 %v290, %v289
      %v303 = vpack.c.b16 %v292, %v291
      %v304 = vpack.c.b16 %v294, %v293
      %v305 = vpack.c.b16 %v296, %v295
      %v306 = vpack.c.b16 %v298, %v297
      %315 = vmatpush.bf16.msra.mxu0 %v306
      %316 = vmatpush.bf16.msra.mxu0 %v305
      %317 = vmatpush.bf16.msra.mxu0 %v304
      %318 = vmatpush.bf16.msra.mxu0 %v303
      %319 = vmatpush.bf16.msra.mxu0 %v302
      %320 = vmatpush.bf16.msra.mxu0 %v301
      %321 = vmatpush.bf16.msra.mxu0 %v300
      %322 = vmatpush.bf16.msra.mxu0 %v299
      %323 = vmatmul.bf16.gmra.mxu0 %v248
      %v324 = vpop.f32.mrf.mxu0
      %v325 = vadd.f32 %v266, %v324
      %v326 = vpop.f32.mrf.mxu0
      %327 = vdwg.mxu0
      %v328 = vrot.slane %v325, 4
      %v329 = vadd.f32 %v325, %v328
      %v330 = vrot.slane %v329, 2
      %v331 = vadd.f32 %v329, %v330
      %v332 = vrot.slane %v331, 1
      %v333 = vadd.f32 %v331, %v332
      %v334 = vrcp.pop 8.0
      %v335 = vmul.f32 8.0, %v334
      %v336 = vsub.f32 1.0, %v335
      %v337 = vmul.f32 %v334, %v336
      %v338 = vadd.f32 %v334, %v337
      %vm339 = vweird.f32 %v334
      %v340 = vsel %vm339, %v334, %v338
      %v341 = vmul.f32 %v333, %v340
      %v342 = vsub.f32 %v325, %v341
      %v343 = vmul.f32 %v342, %v342
      %v344 = vrot.slane %v343, 4
      %v345 = vadd.f32 %v343, %v344
      %v346 = vrot.slane %v345, 2
      %v347 = vadd.f32 %v345, %v346
      %v348 = vrot.slane %v347, 1
      %v349 = vadd.f32 %v347, %v348
      %v350 = vmul.f32 %v349, %v340
      %v351 = vld [vmem:[%s5 + $0x1] sm:$0x1]
      %v352 = vperm.slane %v351, 0
      %v353 = vmul.f32 %v352, %v342
      %v354 = vadd.f32 %v350, 1e-05
      %v355 = vrsqrt.pop %v354
      %v356 = vmul.f32 %v355, %v354
      %v357 = vmul.f32 %v356, %v355
      %v358 = vmul.f32 0.5, %v357
      %v359 = vsub.f32 1.5, %v358
      %v360 = vmul.f32 %v355, %v359
      %vm361 = vweird.f32 %v354
      %vm362 = vweird.f32 %v355
      %vm363 = vmor %vm361, %vm362
      %v364 = vsel %vm363, %v355, %v360
      %v365 = vmul.f32 %v353, %v364
      %v366 = vld [vmem:[%s5 + $0x2] sm:$0x1]
      %v367 = vperm.slane %v366, 0
      %v368 = vadd.f32 %v365, %v367
      %v369 = vmax.f32 %v368, 0.0
      %v370 = vpack.c.bf16 %v369, %v369
      %v371 = vld [vmem:[%s2] sm:$0xf]
      %v372 = vld [vmem:[%s2 + $0x4] sm:$0xf]
      %v373 = vld [vmem:[%s2 + $0x8] sm:$0xf]
      %v374 = vld [vmem:[%s2 + $0xc] sm:$0xf]
      %v375 = vld [vmem:[%s2 + $0x10] sm:$0xf]
      %v376 = vld [vmem:[%s2 + $0x14] sm:$0xf]
      %v377 = vld [vmem:[%s2 + $0x18] sm:$0xf]
      %v378 = vld [vmem:[%s2 + $0x1c] sm:$0xf]
      %v379 = vld [vmem:[%s2 + $0x20] sm:$0xf]
      %v380 = vld [vmem:[%s2 + $0x24] sm:$0xf]
      %v381 = vld [vmem:[%s2 + $0x28] sm:$0xf]
      %v382 = vld [vmem:[%s2 + $0x2c] sm:$0xf]
      %v383 = vld [vmem:[%s2 + $0x30] sm:$0xf]
      %v384 = vld [vmem:[%s2 + $0x34] sm:$0xf]
      %v385 = vld [vmem:[%s2 + $0x38] sm:$0xf]
      %v386 = vld [vmem:[%s2 + $0x3c] sm:$0xf]
      %v387 = vld [vmem:[%s5 + $0x3] sm:$0x1]
      %v388 = vperm.slane %v387, 0
      %v405 = vunpack.c.l.b16 %v371
      %v406 = vunpack.c.l.b16 %v372
      %v407 = vunpack.c.l.b16 %v373
      %v408 = vunpack.c.l.b16 %v374
      %v409 = vunpack.c.l.b16 %v375
      %v410 = vunpack.c.l.b16 %v376
      %v411 = vunpack.c.l.b16 %v377
      %v412 = vunpack.c.l.b16 %v378
      %v413 = vunpack.c.l.b16 %v379
      %v414 = vunpack.c.l.b16 %v380
      %v415 = vunpack.c.l.b16 %v381
      %v416 = vunpack.c.l.b16 %v382
      %v417 = vunpack.c.l.b16 %v383
      %v418 = vunpack.c.l.b16 %v384
      %v419 = vunpack.c.l.b16 %v385
      %v420 = vunpack.c.l.b16 %v386
      %v421 = vpack.c.b16 %v406, %v405
      %v422 = vpack.c.b16 %v408, %v407
      %v423 = vpack.c.b16 %v410, %v409
      %v424 = vpack.c.b16 %v412, %v411
      %v425 = vpack.c.b16 %v414, %v413
      %v426 = vpack.c.b16 %v416, %v415
      %v427 = vpack.c.b16 %v418, %v417
      %v428 = vpack.c.b16 %v420, %v419
      %437 = vmatpush.bf16.msra.mxu0 %v428
      %438 = vmatpush.bf16.msra.mxu0 %v427
      %439 = vmatpush.bf16.msra.mxu0 %v426
      %440 = vmatpush.bf16.msra.mxu0 %v425
      %441 = vmatpush.bf16.msra.mxu0 %v424
      %442 = vmatpush.bf16.msra.mxu0 %v423
      %443 = vmatpush.bf16.msra.mxu0 %v422
      %444 = vmatpush.bf16.msra.mxu0 %v421
      %445 = vmatmul.bf16.gmra.mxu0 %v370
      %v446 = vpop.f32.mrf.mxu0
      %v447 = vadd.f32 %v388, %v446
      %v448 = vpop.f32.mrf.mxu0
      %449 = vdwg.mxu0
      %v450 = vrot.slane %v447, 4
      %v451 = vadd.f32 %v447, %v450
      %v452 = vrot.slane %v451, 2
      %v453 = vadd.f32 %v451, %v452
      %v454 = vrot.slane %v453, 1
      %v455 = vadd.f32 %v453, %v454
      %v456 = vmul.f32 %v455, %v340
      %v457 = vsub.f32 %v447, %v456
      %v458 = vmul.f32 %v457, %v457
      %v459 = vrot.slane %v458, 4
      %v460 = vadd.f32 %v458, %v459
      %v461 = vrot.slane %v460, 2
      %v462 = vadd.f32 %v460, %v461
      %v463 = vrot.slane %v462, 1
      %v464 = vadd.f32 %v462, %v463
      %v465 = vmul.f32 %v464, %v340
      %v466 = vld [vmem:[%s5 + $0x4] sm:$0x1]
      %v467 = vperm.slane %v466, 0
      %v468 = vmul.f32 %v467, %v457
      %v469 = vadd.f32 %v465, 1e-05
      %v470 = vrsqrt.pop %v469
      %v471 = vmul.f32 %v470, %v469
      %v472 = vmul.f32 %v471, %v470
      %v473 = vmul.f32 0.5, %v472
      %v474 = vsub.f32 1.5, %v473
      %v475 = vmul.f32 %v470, %v474
      %vm476 = vweird.f32 %v469
      %vm477 = vweird.f32 %v470
      %vm478 = vmor %vm476, %vm477
      %v479 = vsel %vm478, %v470, %v475
      %v480 = vmul.f32 %v468, %v479
      %v481 = vld [vmem:[%s5 + $0x5] sm:$0x1]
      %v482 = vperm.slane %v481, 0
      %v483 = vadd.f32 %v480, %v482
      %v484 = vmax.f32 %v483, 0.0
      %v485 = vpack.c.bf16 %v484, %v484
      %v486 = vld [vmem:[%s3] sm:$0xf]
      %v487 = vld [vmem:[%s3 + $0x4] sm:$0xf]
      %v488 = vld [vmem:[%s3 + $0x8] sm:$0xf]
      %v489 = vld [vmem:[%s3 + $0xc] sm:$0xf]
      %v490 = vld [vmem:[%s3 + $0x10] sm:$0xf]
      %v491 = vld [vmem:[%s3 + $0x14] sm:$0xf]
      %v492 = vld [vmem:[%s3 + $0x18] sm:$0xf]
      %v493 = vld [vmem:[%s3 + $0x1c] sm:$0xf]
      %v494 = vld [vmem:[%s3 + $0x20] sm:$0xf]
      %v495 = vld [vmem:[%s3 + $0x24] sm:$0xf]
      %v496 = vld [vmem:[%s3 + $0x28] sm:$0xf]
      %v497 = vld [vmem:[%s3 + $0x2c] sm:$0xf]
      %v498 = vld [vmem:[%s3 + $0x30] sm:$0xf]
      %v499 = vld [vmem:[%s3 + $0x34] sm:$0xf]
      %v500 = vld [vmem:[%s3 + $0x38] sm:$0xf]
      %v501 = vld [vmem:[%s3 + $0x3c] sm:$0xf]
      %v502 = vld [vmem:[%s5 + $0x6] sm:$0x1]
      %v503 = vperm.slane %v502, 0
      %v520 = vunpack.c.l.b16 %v486
      %v521 = vunpack.c.l.b16 %v487
      %v522 = vunpack.c.l.b16 %v488
      %v523 = vunpack.c.l.b16 %v489
      %v524 = vunpack.c.l.b16 %v490
      %v525 = vunpack.c.l.b16 %v491
      %v526 = vunpack.c.l.b16 %v492
      %v527 = vunpack.c.l.b16 %v493
      %v528 = vunpack.c.l.b16 %v494
      %v529 = vunpack.c.l.b16 %v495
      %v530 = vunpack.c.l.b16 %v496
      %v531 = vunpack.c.l.b16 %v497
      %v532 = vunpack.c.l.b16 %v498
      %v533 = vunpack.c.l.b16 %v499
      %v534 = vunpack.c.l.b16 %v500
      %v535 = vunpack.c.l.b16 %v501
      %v536 = vpack.c.b16 %v521, %v520
      %v537 = vpack.c.b16 %v523, %v522
      %v538 = vpack.c.b16 %v525, %v524
      %v539 = vpack.c.b16 %v527, %v526
      %v540 = vpack.c.b16 %v529, %v528
      %v541 = vpack.c.b16 %v531, %v530
      %v542 = vpack.c.b16 %v533, %v532
      %v543 = vpack.c.b16 %v535, %v534
      %552 = vmatpush.bf16.msra.mxu0 %v543
      %553 = vmatpush.bf16.msra.mxu0 %v542
      %554 = vmatpush.bf16.msra.mxu0 %v541
      %555 = vmatpush.bf16.msra.mxu0 %v540
      %556 = vmatpush.bf16.msra.mxu0 %v539
      %557 = vmatpush.bf16.msra.mxu0 %v538
      %558 = vmatpush.bf16.msra.mxu0 %v537
      %559 = vmatpush.bf16.msra.mxu0 %v536
      %560 = vmatmul.bf16.gmra.mxu0 %v485
      %v561 = vpop.f32.mrf.mxu0
      %v562 = vadd.f32 %v503, %v561
      %v563 = vpop.f32.mrf.mxu0
      %564 = vdwg.mxu0
      %v565 = vrot.slane %v562, 4
      %v566 = vadd.f32 %v562, %v565
      %v567 = vrot.slane %v566, 2
      %v568 = vadd.f32 %v566, %v567
      %v569 = vrot.slane %v568, 1
      %v570 = vadd.f32 %v568, %v569
      %v571 = vmul.f32 %v570, %v340
      %v572 = vsub.f32 %v562, %v571
      %v573 = vmul.f32 %v572, %v572
      %v574 = vrot.slane %v573, 4
      %v575 = vadd.f32 %v573, %v574
      %v576 = vrot.slane %v575, 2
      %v577 = vadd.f32 %v575, %v576
      %v578 = vrot.slane %v577, 1
      %v579 = vadd.f32 %v577, %v578
      %v580 = vmul.f32 %v579, %v340
      %v581 = vld [vmem:[%s5 + $0x7] sm:$0x1]
      %v582 = vperm.slane %v581, 0
      %v583 = vmul.f32 %v582, %v572
      %v584 = vadd.f32 %v580, 1e-05
      %v585 = vrsqrt.pop %v584
      %v586 = vmul.f32 %v585, %v584
      %v587 = vmul.f32 %v586, %v585
      %v588 = vmul.f32 0.5, %v587
      %v589 = vsub.f32 1.5, %v588
      %v590 = vmul.f32 %v585, %v589
      %vm591 = vweird.f32 %v584
      %vm592 = vweird.f32 %v585
      %vm593 = vmor %vm591, %vm592
      %v594 = vsel %vm593, %v585, %v590
      %v595 = vmul.f32 %v583, %v594
      %v596 = vld [vmem:[%s5 + $0x8] sm:$0x1]
      %v597 = vperm.slane %v596, 0
      %v598 = vadd.f32 %v595, %v597
      %v599 = vmax.f32 %v598, 0.0
      %v600 = vpack.c.bf16 %v599, %v599
      %v601 = vld [vmem:[%s4] sm:$0xf]
      %v602 = vld [vmem:[%s4 + $0x4] sm:$0xf]
      %v603 = vld [vmem:[%s4 + $0x8] sm:$0xf]
      %v604 = vld [vmem:[%s4 + $0xc] sm:$0xf]
      %v605 = vld [vmem:[%s4 + $0x10] sm:$0xf]
      %v606 = vld [vmem:[%s4 + $0x14] sm:$0xf]
      %v607 = vld [vmem:[%s4 + $0x18] sm:$0xf]
      %v608 = vld [vmem:[%s4 + $0x1c] sm:$0xf]
      %v609 = vld [vmem:[%s4 + $0x20] sm:$0xf]
      %v610 = vld [vmem:[%s4 + $0x24] sm:$0xf]
      %v611 = vld [vmem:[%s4 + $0x28] sm:$0xf]
      %v612 = vld [vmem:[%s4 + $0x2c] sm:$0xf]
      %v613 = vld [vmem:[%s4 + $0x30] sm:$0xf]
      %v614 = vld [vmem:[%s4 + $0x34] sm:$0xf]
      %v615 = vld [vmem:[%s4 + $0x38] sm:$0xf]
      %v616 = vld [vmem:[%s4 + $0x3c] sm:$0xf]
      %v617 = vld [vmem:[%s5 + $0x9] sm:$0x1]
      %v618 = vperm.slane %v617, 0
      %v635 = vunpack.c.l.b16 %v601
      %v636 = vunpack.c.l.b16 %v602
      %v637 = vunpack.c.l.b16 %v603
      %v638 = vunpack.c.l.b16 %v604
      %v639 = vunpack.c.l.b16 %v605
      %v640 = vunpack.c.l.b16 %v606
      %v641 = vunpack.c.l.b16 %v607
      %v642 = vunpack.c.l.b16 %v608
      %v643 = vunpack.c.l.b16 %v609
      %v644 = vunpack.c.l.b16 %v610
      %v645 = vunpack.c.l.b16 %v611
      %v646 = vunpack.c.l.b16 %v612
      %v647 = vunpack.c.l.b16 %v613
      %v648 = vunpack.c.l.b16 %v614
      %v649 = vunpack.c.l.b16 %v615
      %v650 = vunpack.c.l.b16 %v616
      %v651 = vpack.c.b16 %v636, %v635
      %v652 = vpack.c.b16 %v638, %v637
      %v653 = vpack.c.b16 %v640, %v639
      %v654 = vpack.c.b16 %v642, %v641
      %v655 = vpack.c.b16 %v644, %v643
      %v656 = vpack.c.b16 %v646, %v645
      %v657 = vpack.c.b16 %v648, %v647
      %v658 = vpack.c.b16 %v650, %v649
      %667 = vmatpush.bf16.msra.mxu0 %v658
      %668 = vmatpush.bf16.msra.mxu0 %v657
      %669 = vmatpush.bf16.msra.mxu0 %v656
      %670 = vmatpush.bf16.msra.mxu0 %v655
      %671 = vmatpush.bf16.msra.mxu0 %v654
      %672 = vmatpush.bf16.msra.mxu0 %v653
      %673 = vmatpush.bf16.msra.mxu0 %v652
      %674 = vmatpush.bf16.msra.mxu0 %v651
      %675 = vmatmul.bf16.gmra.mxu0 %v600
      %v676 = vpop.f32.mrf.mxu0
      %v677 = vadd.f32 %v618, %v676
      %v678 = vpop.f32.mrf.mxu0
      %679 = vdwg.mxu0
      %680 = vst [vmem:[%s246] sm:$0xff] %v677
      %p681 = scmp.lt.s32.totalorder %s17, 1
      %s682 = scalar_select %p681, %s17, 1
      %s683 = smul.addr %s682, 8
      %s684 = scalar_lea.vmem %s6, %s683
      // Predicated region
      $region45: #{scarf_custom_forward.3} parent=43 // pred_check
        %p685 = pneg %p166
      $region46: #{scarf_custom_forward.3} parent=43 // pred_check_branch
        %687 = sbr.rel (%p685) target = $region48
      $region47: #{scarf_custom_forward.3} parent=43 // pred_region
        _
      $region48: #{scarf_custom_forward.3} parent=43 // pred_fallthru
        _
    $region44: #{scarf_custom_forward.3} parent=5 // pred_fallthru
      _
    %p688 = scmp.le.s32.totalorder 2, %s12
    // Predicated region
    $region49: #{scarf_custom_forward.3} parent=5 // pred_check
      %p689 = pneg %p688
    $region50: #{scarf_custom_forward.3} parent=5 // pred_check_branch
      %691 = sbr.rel (%p689) target = $region52
    $region51: #{scarf_custom_forward.3} parent=5 // pred_region
      %s692 = ssub.s32 %s12, 2
      // Predicated region
      $region53: #{scarf_custom_forward.3} parent=51 // pred_check
        %p693 = pneg %p172
      $region54: #{scarf_custom_forward.3} parent=51 // pred_check_branch
        %695 = sbr.rel (%p693) target = $region56
      $region55: #{scarf_custom_forward.3} parent=51 // pred_region
        %p696 = scmp.lt.s32.totalorder %s18, 1
        %s697 = scalar_select %p696, %s18, 1
        %s698 = smul.addr %s697, 8
        %s699 = scalar_lea.vmem %s6, %s698
      $region56: #{scarf_custom_forward.3} parent=51 // pred_fallthru
        _
    $region52: #{scarf_custom_forward.3} parent=5 // pred_fallthru
      _
  $region6: #{scarf_custom_forward.3} parent=0 // loop_footer
    %s16 = sadd.s32 1, %s12
  $region7: #{scarf_custom_forward.3} parent=0 // loop_footer_branch
    %11 = sbr.rel target = $region3
  $region8: #{scarf_custom_forward.3} parent=0 // loop_exit
    _

</llo_original>
